<compile_context>
chip_gen: v7x
topology: tpu7x:2x2x1
jax: 0.10.0
libtpu: 0.0.40
codegen_flags: <defaults>
</compile_context>

<pallas_src>
import jax
import jax.numpy as jnp
from jax.experimental import pallas as pl
from jax.experimental.pallas import tpu as pltpu

_LANE = 128
_SUB = 16          # sublane multiple used for row tiles (bf16-friendly)


def _round_up(x, m):
    return (x + m - 1) // m * m


def _cdiv(a, b):
    return (a + b - 1) // b


def _choose_tile_k(in_size, max_tile_k):
    """Pick a K tile that exactly divides in_size (or use the full extent)."""
    if in_size <= max_tile_k or in_size % _LANE != 0:
        return in_size
    for cand in range(max_tile_k, _LANE - 1, -_LANE):
        if in_size % cand == 0:
            return cand
    return in_size


def _choose_tile_n(n, max_tile_n, tile_k):
    if n <= _SUB:
        tile_n = _SUB
    elif n <= max_tile_n:
        # Guarantee >= 2 grid steps so the "parallel" N axis can shard across
        # v7x's two TensorCores instead of collapsing to grid=(1,).
        tile_n = _round_up(_cdiv(n, 2), _SUB)
    else:
        tile_n = max_tile_n
    # Keep the double-buffered f32 feats block comfortably inside scoped VMEM.
    while tile_n > _SUB and 2 * tile_n * tile_k * 4 > (12 << 20):
        tile_n = max(_SUB, _round_up(tile_n // 2, _SUB))
    return tile_n


def _fc_kernel(feats_ref, wt_ref, b_ref, out_ref, acc_ref):
    k = pl.program_id(1)

    @pl.when(k == 0)
    def _():
        acc_ref[...] = jnp.zeros_like(acc_ref)

    # f32 feats streamed from HBM; free in-kernel VPU cast to bf16 feeds the
    # MXU, which accumulates in f32.
    acc_ref[...] += jnp.dot(
        feats_ref[...].astype(jnp.bfloat16),
        wt_ref[...],
        preferred_element_type=jnp.float32,
    )

    @pl.when(k == pl.num_programs(1) - 1)
    def _():
        out_ref[...] = (acc_ref[...] + b_ref[...]).astype(out_ref.dtype)


def prepare_fc_params(weight, bias):
    """One-time prep of the nn.Linear parameters (hoist out of the forward).

    weight: (out_size, in_size) f32  (PyTorch nn.Linear convention)
    bias:   (out_size,) f32
    Returns (wt, b2, out_size): wt (in_size, out_pad) bf16, b2 (1, out_pad) f32.
    """
    out_size, in_size = weight.shape
    out_pad = _round_up(out_size, _LANE)
    wt = jnp.zeros((in_size, out_pad), jnp.bfloat16)
    wt = wt.at[:, :out_size].set(weight.T.astype(jnp.bfloat16))
    b2 = jnp.zeros((1, out_pad), jnp.float32)
    b2 = b2.at[:, :out_size].set(bias.astype(jnp.float32))
    return wt, b2, out_size


def iclassifier_fc_forward(feats, wt, b2, out_size, *,
                           max_tile_n=1024, max_tile_k=1024):
    """Pallas nn.Linear head: feats @ W.T + b with prepared params."""
    n, in_size = feats.shape
    out_pad = wt.shape[1]
    assert wt.shape[0] == in_size

    if n == 0:
        return jnp.zeros((0, out_size), jnp.float32)

    tile_k = _choose_tile_k(in_size, max_tile_k)
    tile_n = _choose_tile_n(n, max_tile_n, tile_k)
    grid_n = _cdiv(n, tile_n)
    grid_k = _cdiv(in_size, tile_k)

    # Explicit scoped-VMEM budget for the chosen tiling (plus headroom).
    vmem_bytes = (
        2 * tile_n * tile_k * 4        # f32 feats, double-buffered
        + tile_n * tile_k * 2          # bf16 cast temp
        + 2 * tile_k * out_pad * 2     # bf16 weight, double-buffered
        + 2 * out_pad * 4              # f32 bias
        + 2 * tile_n * out_pad * 2     # bf16 logits out, double-buffered
        + tile_n * out_pad * 4         # f32 accumulator scratch
    )
    vmem_limit = min(max(int(vmem_bytes * 1.25) + (1 << 20), 16 << 20), 64 << 20)

    weight_bytes = in_size * out_pad * 2 * (grid_n if grid_k > 1 else 1)
    cost = pl.CostEstimate(
        flops=2 * n * in_size * out_pad,
        transcendentals=0,
        bytes_accessed=(
            n * in_size * 4      # f32 feats in
            + weight_bytes       # bf16 weight in
            + out_pad * 4        # f32 bias in
            + n * out_pad * 2    # bf16 logits out
        ),
    )

    out_bf16 = pl.pallas_call(
        _fc_kernel,
        out_shape=jax.ShapeDtypeStruct((n, out_pad), jnp.bfloat16),
        grid_spec=pltpu.PrefetchScalarGridSpec(
            num_scalar_prefetch=0,
            grid=(grid_n, grid_k),
            in_specs=[
                # feats tiles stream along (N, K); partial last N block is
                # handled by Pallas (OOB rows -> discarded output rows).
                pl.BlockSpec((tile_n, tile_k), lambda i, k: (i, k)),
                # weight block follows K; resident when grid_k == 1.
                pl.BlockSpec((tile_k, out_pad), lambda i, k: (k, 0)),
                # bias is resident (constant block index -> DMA'd once).
                pl.BlockSpec((1, out_pad), lambda i, k: (0, 0)),
            ],
            out_specs=pl.BlockSpec((tile_n, out_pad), lambda i, k: (i, 0)),
            scratch_shapes=[pltpu.VMEM((tile_n, out_pad), jnp.float32)],
        ),
        compiler_params=pltpu.CompilerParams(
            dimension_semantics=("parallel", "arbitrary"),
            vmem_limit_bytes=vmem_limit,
        ),
        cost_estimate=cost,
    )(feats, wt, b2)

    # Slice off the lane padding and restore f32 logits (tiny).
    return out_bf16[:, :out_size].astype(jnp.float32)


def iclassifier_forward(x, fc_params, feature_extractor=None):
    """Full IClassifier.forward: returns (feats_flat, logits)."""
    # TODO(synk): feature_extractor is an arbitrary injected backbone (e.g. a
    # ResNet) in DS-MIL with no generic Pallas equivalent; identity is used so
    # feats == x, flattened per-instance exactly like feats.view(N, -1).
    feats = x if feature_extractor is None else feature_extractor(x)
    feats = feats.reshape(feats.shape[0], -1)
    wt, b2, out_size = fc_params
    c = iclassifier_fc_forward(feats, wt, b2, out_size)
    return feats, c


if __name__ == "__main__":
    # Small-but-realistic shapes: N=8 instances (patches), each a 4x16x16 map
    # -> feature_size = 4*16*16 = 1024, output_class = 2.
    N, C, H, W = 8, 4, 16, 16
    FEATURE_SIZE = C * H * W
    OUTPUT_CLASS = 2

    key = jax.random.PRNGKey(0)
    k_x, k_w, k_b = jax.random.split(key, 3)

    x = jax.random.normal(k_x, (N, C, H, W), dtype=jnp.float32)
    weight = jax.random.normal(k_w, (OUTPUT_CLASS, FEATURE_SIZE), dtype=jnp.float32) * 0.1
    bias = jax.random.normal(k_b, (OUTPUT_CLASS,), dtype=jnp.float32) * 0.1

    # One-time parameter prep, hoisted out of the per-forward path.
    fc_params = prepare_fc_params(weight, bias)

    # Keep the pallas_call inside the caller's jit.
    fwd = jax.jit(lambda xx: iclassifier_forward(xx, fc_params))

    feats_out, c = fwd(x)
    jax.block_until_ready((feats_out, c))

    # Reference (f32). Kernel computes in bf16 on the MXU, so modest tolerance.
    feats_ref = x.reshape(N, -1)
    c_ref = feats_ref @ weight.T + bias

    assert feats_out.shape == (N, FEATURE_SIZE)
    assert c.shape == (N, OUTPUT_CLASS)
    assert jnp.allclose(feats_out, feats_ref)
    assert jnp.allclose(c, c_ref, atol=5e-2, rtol=2e-2), (
        f"max abs err {jnp.max(jnp.abs(c - c_ref))}"
    )

    print("KERNEL_OK")
</pallas_src>

<mosaic_0001>
module attributes {stable_mosaic.version = 11 : i64} {
  func.func @_fc_kernel(%arg0: i32, %arg1: i32, %arg2: memref<16x1024xf32, #tpu.memory_space<vmem>>, %arg3: memref<1024x128xbf16, #tpu.memory_space<vmem>>, %arg4: memref<1x128xf32, #tpu.memory_space<vmem>>, %arg5: memref<16x128xbf16, #tpu.memory_space<vmem>>, %arg6: memref<16x128xf32, #tpu.memory_space<vmem>>) attributes {dimension_semantics = [#tpu.dimension_semantics<parallel>, #tpu.dimension_semantics<arbitrary>], iteration_bounds = array<i64: 1, 1>, scalar_prefetch = 0 : i64, scratch_operands = 1 : i64, tpu.core_type = #tpu.core_type<tc>, window_params = [{transform_indices = @transform_0, window_bounds = array<i64: 16, 1024>}, {transform_indices = @transform_1, window_bounds = array<i64: 1024, 128>}, {pipeline_mode = #tpu.pipeline_mode<synchronous>, transform_indices = @transform_2, window_bounds = array<i64: 1, 128>}, {transform_indices = @transform_3, window_bounds = array<i64: 16, 128>}]} {
    %c0_i32 = arith.constant 0 : i32
    %0 = arith.cmpi eq, %arg1, %c0_i32 : i32
    %1 = arith.extui %0 : i1 to i32
    %c0_i32_0 = arith.constant 0 : i32
    %2 = arith.cmpi ne, %1, %c0_i32_0 : i32
    scf.if %2 {
      %cst_10 = arith.constant 0.000000e+00 : f32
      %13 = vector.broadcast %cst_10 : f32 to vector<16x128xf32>
      %c0_11 = arith.constant 0 : index
      %c0_12 = arith.constant 0 : index
      %14 = vector.load %arg6[%c0_11, %c0_12] : memref<16x128xf32, #tpu.memory_space<vmem>>, vector<16x128xf32>
      tpu.vector_store %arg6[%c0_11, %c0_12], %13 {strides = array<i32>} : memref<16x128xf32, #tpu.memory_space<vmem>>, vector<16x128xf32>,
    } else {
    }
    %c0 = arith.constant 0 : index
    %c0_1 = arith.constant 0 : index
    %3 = vector.load %arg6[%c0, %c0_1] : memref<16x128xf32, #tpu.memory_space<vmem>>, vector<16x128xf32>
    %c0_2 = arith.constant 0 : index
    %c0_3 = arith.constant 0 : index
    %4 = vector.load %arg2[%c0_2, %c0_3] : memref<16x1024xf32, #tpu.memory_space<vmem>>, vector<16x1024xf32>
    %5 = arith.truncf %4 : vector<16x1024xf32> to vector<16x1024xbf16>
    %c0_4 = arith.constant 0 : index
    %c0_5 = arith.constant 0 : index
    %6 = vector.load %arg3[%c0_4, %c0_5] : memref<1024x128xbf16, #tpu.memory_space<vmem>>, vector<1024x128xbf16>
    %cst = arith.constant dense<0.000000e+00> : vector<16x128xf32>
    %7 = tpu.matmul %5, %6, %cst {dimension_numbers = #tpu.dot_dimension_numbers<[1], [0], [0], [1], [0, 0, 1, 1], [], []>} : vector<16x1024xbf16>, vector<1024x128xbf16>, vector<16x128xf32> -> vector<16x128xf32>
    %8 = arith.addf %3, %7 : vector<16x128xf32>
    %c0_6 = arith.constant 0 : index
    %c0_7 = arith.constant 0 : index
    %9 = vector.load %arg6[%c0_6, %c0_7] : memref<16x128xf32, #tpu.memory_space<vmem>>, vector<16x128xf32>
    tpu.vector_store %arg6[%c0_6, %c0_7], %8 {strides = array<i32>} : memref<16x128xf32, #tpu.memory_space<vmem>>, vector<16x128xf32>,
    %c0_i32_8 = arith.constant 0 : i32
    %10 = arith.cmpi eq, %arg1, %c0_i32_8 : i32
    %11 = arith.extui %10 : i1 to i32
    %c0_i32_9 = arith.constant 0 : i32
    %12 = arith.cmpi ne, %11, %c0_i32_9 : i32
    scf.if %12 {
      %c0_10 = arith.constant 0 : index
      %c0_11 = arith.constant 0 : index
      %13 = vector.load %arg6[%c0_10, %c0_11] : memref<16x128xf32, #tpu.memory_space<vmem>>, vector<16x128xf32>
      %c0_12 = arith.constant 0 : index
      %c0_13 = arith.constant 0 : index
      %14 = vector.load %arg4[%c0_12, %c0_13] : memref<1x128xf32, #tpu.memory_space<vmem>>, vector<1x128xf32>
      %15 = vector.broadcast %14 : vector<1x128xf32> to vector<16x128xf32>
      %16 = arith.addf %13, %15 : vector<16x128xf32>
      %17 = arith.truncf %16 : vector<16x128xf32> to vector<16x128xbf16>
      %c0_14 = arith.constant 0 : index
      %c0_15 = arith.constant 0 : index
      %18 = vector.load %arg5[%c0_14, %c0_15] : memref<16x128xbf16, #tpu.memory_space<vmem>>, vector<16x128xbf16>
      tpu.vector_store %arg5[%c0_14, %c0_15], %17 {strides = array<i32>} : memref<16x128xbf16, #tpu.memory_space<vmem>>, vector<16x128xbf16>,
    } else {
    }
    return
  }
  func.func @transform_0(%arg0: i32, %arg1: i32) -> (i32, i32) {
    %c0_i32 = arith.constant 0 : i32
    return %arg0, %arg1 : i32, i32
  }
  func.func @transform_1(%arg0: i32, %arg1: i32) -> (i32, i32) {
    %c0_i32 = arith.constant 0 : i32
    %c0_i32_0 = arith.constant 0 : i32
    return %arg1, %c0_i32 : i32, i32
  }
  func.func @transform_2(%arg0: i32, %arg1: i32) -> (i32, i32) {
    %c0_i32 = arith.constant 0 : i32
    %c0_i32_0 = arith.constant 0 : i32
    %c0_i32_1 = arith.constant 0 : i32
    return %c0_i32, %c0_i32_0 : i32, i32
  }
  func.func @transform_3(%arg0: i32, %arg1: i32) -> (i32, i32) {
    %c0_i32 = arith.constant 0 : i32
    %c0_i32_0 = arith.constant 0 : i32
    return %arg0, %c0_i32 : i32, i32
  }
}

</mosaic_0001>

<llo_original>
// kernel: _lambda_.1
$region0: #{_lambda_.1}
  #allocation0 [shape = 'u32[]', space=smem, size = 0x4, offset = 0x4, fixed_abs, tag = 'smem constant byte address 0x4 - core index']
  #allocation1 [shape = 'u32[144,128]{1,0:T(1,128)}', space=vmem, size = 0x12000, scoped, tag = 'internal scratch']
  #allocation2 [shape = 'f32[16,128]{1,0:T(8,128)}', space=vmem, size = 0x2000, scoped, tag = 'scratch operand']
  %s0 = inlined_call_operand.vmem [shape: f32[8,1024], index: 0, kind: input, shape index: {}]
  %s1 = inlined_call_operand.vmem [shape: bf16[1024,128], index: 1, kind: input, shape index: {}]
  %s2 = inlined_call_operand.vmem [shape: f32[1,128], index: 2, kind: input, shape index: {}]
  %s3 = inlined_call_operand.vmem [shape: bf16[8,128], index: 3, kind: output, shape index: {}]
  %s4 = sld [smem:[#allocation0]]
  $region60: #{_lambda_.1} parent=0
    _
  %s6 = ssub.s32 1, %s4
  %s7 = scalar_select 0, %s6, %s4
  $region1: #{_lambda_.1} parent=0
    #allocation3 [shape = 'u8[4096]{0}', space=vmem, size = 0x1000, scoped, tag = 'output window, operand 0, single buffered']
    // Predicated region
    $region2: #{_lambda_.1} parent=1 // pred_check
      _
    $region3: #{_lambda_.1} parent=1 // pred_check_branch
      %9 = sbr.rel (0) target = $region5
    $region4: #{_lambda_.1} parent=1 // pred_region
      _
    $region5: #{_lambda_.1} parent=1 // pred_fallthru
      _
    // Predicated region
    $region6: #{_lambda_.1} parent=1 // pred_check
      _
    $region7: #{_lambda_.1} parent=1 // pred_check_branch
      %11 = sbr.rel (0) target = $region9
    $region8: #{_lambda_.1} parent=1 // pred_region
      _
    $region9: #{_lambda_.1} parent=1 // pred_fallthru
      _
    // Predicated region
    $region10: #{_lambda_.1} parent=1 // pred_check
      _
    $region11: #{_lambda_.1} parent=1 // pred_check_branch
      %13 = sbr.rel (0) target = $region13
    $region12: #{_lambda_.1} parent=1 // pred_region
      _
    $region13: #{_lambda_.1} parent=1 // pred_fallthru
      _
    %p15 = scmp.eq.s32.totalorder 0, 0
    // Predicated region
    $region14: #{_lambda_.1} parent=1 // pred_check
      %p16 = pneg %p15
    $region15: #{_lambda_.1} parent=1 // pred_check_branch
      %18 = sbr.rel (%p16) target = $region17
    $region16: #{_lambda_.1} parent=1 // pred_region
      %19 = vst [vmem:[#allocation2] sm:$0xff] 0.0
      %20 = vst [vmem:[#allocation2 + $0x8] sm:$0xff] 0.0
    $region17: #{_lambda_.1} parent=1 // pred_fallthru
      _
    %v21 = vld [vmem:[#allocation2] sm:$0xff]
    %v22 = vld [vmem:[#allocation2 + $0x8] sm:$0xff]
    %v23 = vld [vmem:[%s0] sm:$0xff]
    %v24 = vld [vmem:[%s0 + $0x8] sm:$0xff]
    %v25 = vld [vmem:[%s0 + $0x10] sm:$0xff]
    %v26 = vld [vmem:[%s0 + $0x18] sm:$0xff]
    %v27 = vld [vmem:[%s0 + $0x20] sm:$0xff]
    %v28 = vld [vmem:[%s0 + $0x28] sm:$0xff]
    %v29 = vld [vmem:[%s0 + $0x30] sm:$0xff]
    %v30 = vld [vmem:[%s0 + $0x38] sm:$0xff]
    %v31 = vld [vmem:[%s0 + $0x40] sm:$0xff]
    %v32 = vld [vmem:[%s0 + $0x48] sm:$0xff]
    %v33 = vld [vmem:[%s0 + $0x50] sm:$0xff]
    %v34 = vld [vmem:[%s0 + $0x58] sm:$0xff]
    %v35 = vld [vmem:[%s0 + $0x60] sm:$0xff]
    %v36 = vld [vmem:[%s0 + $0x68] sm:$0xff]
    %v37 = vld [vmem:[%s0 + $0x70] sm:$0xff]
    %v38 = vld [vmem:[%s0 + $0x78] sm:$0xff]
    %v39 = vpack.c.bf16 %v31, %v23
    %v40 = vpack.c.bf16 %v32, %v24
    %v41 = vpack.c.bf16 %v33, %v25
    %v42 = vpack.c.bf16 %v34, %v26
    %v43 = vpack.c.bf16 %v35, %v27
    %v44 = vpack.c.bf16 %v36, %v28
    %v45 = vpack.c.bf16 %v37, %v29
    %v46 = vpack.c.bf16 %v38, %v30
    %v47 = vld [vmem:[%s1] sm:$0xf]
    %v48 = vld [vmem:[%s1 + $0x4] sm:$0xf]
    %v49 = vld [vmem:[%s1 + $0x8] sm:$0xf]
    %v50 = vld [vmem:[%s1 + $0xc] sm:$0xf]
    %v51 = vld [vmem:[%s1 + $0x10] sm:$0xf]
    %v52 = vld [vmem:[%s1 + $0x14] sm:$0xf]
    %v53 = vld [vmem:[%s1 + $0x18] sm:$0xf]
    %v54 = vld [vmem:[%s1 + $0x1c] sm:$0xf]
    %v55 = vld [vmem:[%s1 + $0x20] sm:$0xf]
    %v56 = vld [vmem:[%s1 + $0x24] sm:$0xf]
    %v57 = vld [vmem:[%s1 + $0x28] sm:$0xf]
    %v58 = vld [vmem:[%s1 + $0x2c] sm:$0xf]
    %v59 = vld [vmem:[%s1 + $0x30] sm:$0xf]
    %v60 = vld [vmem:[%s1 + $0x34] sm:$0xf]
    %v61 = vld [vmem:[%s1 + $0x38] sm:$0xf]
    %v62 = vld [vmem:[%s1 + $0x3c] sm:$0xf]
    %v63 = vld [vmem:[%s1 + $0x40] sm:$0xf]
    %v64 = vld [vmem:[%s1 + $0x44] sm:$0xf]
    %v65 = vld [vmem:[%s1 + $0x48] sm:$0xf]
    %v66 = vld [vmem:[%s1 + $0x4c] sm:$0xf]
    %v67 = vld [vmem:[%s1 + $0x50] sm:$0xf]
    %v68 = vld [vmem:[%s1 + $0x54] sm:$0xf]
    %v69 = vld [vmem:[%s1 + $0x58] sm:$0xf]
    %v70 = vld [vmem:[%s1 + $0x5c] sm:$0xf]
    %v71 = vld [vmem:[%s1 + $0x60] sm:$0xf]
    %v72 = vld [vmem:[%s1 + $0x64] sm:$0xf]
    %v73 = vld [vmem:[%s1 + $0x68] sm:$0xf]
    %v74 = vld [vmem:[%s1 + $0x6c] sm:$0xf]
    %v75 = vld [vmem:[%s1 + $0x70] sm:$0xf]
    %v76 = vld [vmem:[%s1 + $0x74] sm:$0xf]
    %v77 = vld [vmem:[%s1 + $0x78] sm:$0xf]
    %v78 = vld [vmem:[%s1 + $0x7c] sm:$0xf]
    %v79 = vld [vmem:[%s1 + $0x80] sm:$0xf]
    %v80 = vld [vmem:[%s1 + $0x84] sm:$0xf]
    %v81 = vld [vmem:[%s1 + $0x88] sm:$0xf]
    %v82 = vld [vmem:[%s1 + $0x8c] sm:$0xf]
    %v83 = vld [vmem:[%s1 + $0x90] sm:$0xf]
    %v84 = vld [vmem:[%s1 + $0x94] sm:$0xf]
    %v85 = vld [vmem:[%s1 + $0x98] sm:$0xf]
    %v86 = vld [vmem:[%s1 + $0x9c] sm:$0xf]
    %v87 = vld [vmem:[%s1 + $0xa0] sm:$0xf]
    %v88 = vld [vmem:[%s1 + $0xa4] sm:$0xf]
    %v89 = vld [vmem:[%s1 + $0xa8] sm:$0xf]
    %v90 = vld [vmem:[%s1 + $0xac] sm:$0xf]
    %v91 = vld [vmem:[%s1 + $0xb0] sm:$0xf]
    %v92 = vld [vmem:[%s1 + $0xb4] sm:$0xf]
    %v93 = vld [vmem:[%s1 + $0xb8] sm:$0xf]
    %v94 = vld [vmem:[%s1 + $0xbc] sm:$0xf]
    %v95 = vld [vmem:[%s1 + $0xc0] sm:$0xf]
    %v96 = vld [vmem:[%s1 + $0xc4] sm:$0xf]
    %v97 = vld [vmem:[%s1 + $0xc8] sm:$0xf]
    %v98 = vld [vmem:[%s1 + $0xcc] sm:$0xf]
    %v99 = vld [vmem:[%s1 + $0xd0] sm:$0xf]
    %v100 = vld [vmem:[%s1 + $0xd4] sm:$0xf]
    %v101 = vld [vmem:[%s1 + $0xd8] sm:$0xf]
    %v102 = vld [vmem:[%s1 + $0xdc] sm:$0xf]
    %v103 = vld [vmem:[%s1 + $0xe0] sm:$0xf]
    %v104 = vld [vmem:[%s1 + $0xe4] sm:$0xf]
    %v105 = vld [vmem:[%s1 + $0xe8] sm:$0xf]
    %v106 = vld [vmem:[%s1 + $0xec] sm:$0xf]
    %v107 = vld [vmem:[%s1 + $0xf0] sm:$0xf]
    %v108 = vld [vmem:[%s1 + $0xf4] sm:$0xf]
    %v109 = vld [vmem:[%s1 + $0xf8] sm:$0xf]
    %v110 = vld [vmem:[%s1 + $0xfc] sm:$0xf]
    %v111 = vld [vmem:[%s1 + $0x100] sm:$0xf]
    %v112 = vld [vmem:[%s1 + $0x104] sm:$0xf]
    %v113 = vld [vmem:[%s1 + $0x108] sm:$0xf]
    %v114 = vld [vmem:[%s1 + $0x10c] sm:$0xf]
    %v115 = vld [vmem:[%s1 + $0x110] sm:$0xf]
    %v116 = vld [vmem:[%s1 + $0x114] sm:$0xf]
    %v117 = vld [vmem:[%s1 + $0x118] sm:$0xf]
    %v118 = vld [vmem:[%s1 + $0x11c] sm:$0xf]
    %v119 = vld [vmem:[%s1 + $0x120] sm:$0xf]
    %v120 = vld [vmem:[%s1 + $0x124] sm:$0xf]
    %v121 = vld [vmem:[%s1 + $0x128] sm:$0xf]
    %v122 = vld [vmem:[%s1 + $0x12c] sm:$0xf]
    %v123 = vld [vmem:[%s1 + $0x130] sm:$0xf]
    %v124 = vld [vmem:[%s1 + $0x134] sm:$0xf]
    %v125 = vld [vmem:[%s1 + $0x138] sm:$0xf]
    %v126 = vld [vmem:[%s1 + $0x13c] sm:$0xf]
    %v127 = vld [vmem:[%s1 + $0x140] sm:$0xf]
    %v128 = vld [vmem:[%s1 + $0x144] sm:$0xf]
    %v129 = vld [vmem:[%s1 + $0x148] sm:$0xf]
    %v130 = vld [vmem:[%s1 + $0x14c] sm:$0xf]
    %v131 = vld [vmem:[%s1 + $0x150] sm:$0xf]
    %v132 = vld [vmem:[%s1 + $0x154] sm:$0xf]
    %v133 = vld [vmem:[%s1 + $0x158] sm:$0xf]
    %v134 = vld [vmem:[%s1 + $0x15c] sm:$0xf]
    %v135 = vld [vmem:[%s1 + $0x160] sm:$0xf]
    %v136 = vld [vmem:[%s1 + $0x164] sm:$0xf]
    %v137 = vld [vmem:[%s1 + $0x168] sm:$0xf]
    %v138 = vld [vmem:[%s1 + $0x16c] sm:$0xf]
    %v139 = vld [vmem:[%s1 + $0x170] sm:$0xf]
    %v140 = vld [vmem:[%s1 + $0x174] sm:$0xf]
    %v141 = vld [vmem:[%s1 + $0x178] sm:$0xf]
    %v142 = vld [vmem:[%s1 + $0x17c] sm:$0xf]
    %v143 = vld [vmem:[%s1 + $0x180] sm:$0xf]
    %v144 = vld [vmem:[%s1 + $0x184] sm:$0xf]
    %v145 = vld [vmem:[%s1 + $0x188] sm:$0xf]
    %v146 = vld [vmem:[%s1 + $0x18c] sm:$0xf]
    %v147 = vld [vmem:[%s1 + $0x190] sm:$0xf]
    %v148 = vld [vmem:[%s1 + $0x194] sm:$0xf]
    %v149 = vld [vmem:[%s1 + $0x198] sm:$0xf]
    %v150 = vld [vmem:[%s1 + $0x19c] sm:$0xf]
    %v151 = vld [vmem:[%s1 + $0x1a0] sm:$0xf]
    %v152 = vld [vmem:[%s1 + $0x1a4] sm:$0xf]
    %v153 = vld [vmem:[%s1 + $0x1a8] sm:$0xf]
    %v154 = vld [vmem:[%s1 + $0x1ac] sm:$0xf]
    %v155 = vld [vmem:[%s1 + $0x1b0] sm:$0xf]
    %v156 = vld [vmem:[%s1 + $0x1b4] sm:$0xf]
    %v157 = vld [vmem:[%s1 + $0x1b8] sm:$0xf]
    %v158 = vld [vmem:[%s1 + $0x1bc] sm:$0xf]
    %v159 = vld [vmem:[%s1 + $0x1c0] sm:$0xf]
    %v160 = vld [vmem:[%s1 + $0x1c4] sm:$0xf]
    %v161 = vld [vmem:[%s1 + $0x1c8] sm:$0xf]
    %v162 = vld [vmem:[%s1 + $0x1cc] sm:$0xf]
    %v163 = vld [vmem:[%s1 + $0x1d0] sm:$0xf]
    %v164 = vld [vmem:[%s1 + $0x1d4] sm:$0xf]
    %v165 = vld [vmem:[%s1 + $0x1d8] sm:$0xf]
    %v166 = vld [vmem:[%s1 + $0x1dc] sm:$0xf]
    %v167 = vld [vmem:[%s1 + $0x1e0] sm:$0xf]
    %v168 = vld [vmem:[%s1 + $0x1e4] sm:$0xf]
    %v169 = vld [vmem:[%s1 + $0x1e8] sm:$0xf]
    %v170 = vld [vmem:[%s1 + $0x1ec] sm:$0xf]
    %v171 = vld [vmem:[%s1 + $0x1f0] sm:$0xf]
    %v172 = vld [vmem:[%s1 + $0x1f4] sm:$0xf]
    %v173 = vld [vmem:[%s1 + $0x1f8] sm:$0xf]
    %v174 = vld [vmem:[%s1 + $0x1fc] sm:$0xf]
    %v303 = vunpack.c.l.b16 %v47
    %v304 = vunpack.c.l.b16 %v48
    %v305 = vunpack.c.l.b16 %v49
    %v306 = vunpack.c.l.b16 %v50
    %v307 = vunpack.c.l.b16 %v51
    %v308 = vunpack.c.l.b16 %v52
    %v309 = vunpack.c.l.b16 %v53
    %v310 = vunpack.c.l.b16 %v54
    %v311 = vunpack.c.l.b16 %v55
    %v312 = vunpack.c.l.b16 %v56
    %v313 = vunpack.c.l.b16 %v57
    %v314 = vunpack.c.l.b16 %v58
    %v315 = vunpack.c.l.b16 %v59
    %v316 = vunpack.c.l.b16 %v60
    %v317 = vunpack.c.l.b16 %v61
    %v318 = vunpack.c.l.b16 %v62
    %v319 = vunpack.c.l.b16 %v63
    %v320 = vunpack.c.l.b16 %v64
    %v321 = vunpack.c.l.b16 %v65
    %v322 = vunpack.c.l.b16 %v66
    %v323 = vunpack.c.l.b16 %v67
    %v324 = vunpack.c.l.b16 %v68
    %v325 = vunpack.c.l.b16 %v69
    %v326 = vunpack.c.l.b16 %v70
    %v327 = vunpack.c.l.b16 %v71
    %v328 = vunpack.c.l.b16 %v72
    %v329 = vunpack.c.l.b16 %v73
    %v330 = vunpack.c.l.b16 %v74
    %v331 = vunpack.c.l.b16 %v75
    %v332 = vunpack.c.l.b16 %v76
    %v333 = vunpack.c.l.b16 %v77
    %v334 = vunpack.c.l.b16 %v78
    %v335 = vunpack.c.l.b16 %v79
    %v336 = vunpack.c.l.b16 %v80
    %v337 = vunpack.c.l.b16 %v81
    %v338 = vunpack.c.l.b16 %v82
    %v339 = vunpack.c.l.b16 %v83
    %v340 = vunpack.c.l.b16 %v84
    %v341 = vunpack.c.l.b16 %v85
    %v342 = vunpack.c.l.b16 %v86
    %v343 = vunpack.c.l.b16 %v87
    %v344 = vunpack.c.l.b16 %v88
    %v345 = vunpack.c.l.b16 %v89
    %v346 = vunpack.c.l.b16 %v90
    %v347 = vunpack.c.l.b16 %v91
    %v348 = vunpack.c.l.b16 %v92
    %v349 = vunpack.c.l.b16 %v93
    %v350 = vunpack.c.l.b16 %v94
    %v351 = vunpack.c.l.b16 %v95
    %v352 = vunpack.c.l.b16 %v96
    %v353 = vunpack.c.l.b16 %v97
    %v354 = vunpack.c.l.b16 %v98
    %v355 = vunpack.c.l.b16 %v99
    %v356 = vunpack.c.l.b16 %v100
    %v357 = vunpack.c.l.b16 %v101
    %v358 = vunpack.c.l.b16 %v102
    %v359 = vunpack.c.l.b16 %v103
    %v360 = vunpack.c.l.b16 %v104
    %v361 = vunpack.c.l.b16 %v105
    %v362 = vunpack.c.l.b16 %v106
    %v363 = vunpack.c.l.b16 %v107
    %v364 = vunpack.c.l.b16 %v108
    %v365 = vunpack.c.l.b16 %v109
    %v366 = vunpack.c.l.b16 %v110
    %v367 = vunpack.c.l.b16 %v111
    %v368 = vunpack.c.l.b16 %v112
    %v369 = vunpack.c.l.b16 %v113
    %v370 = vunpack.c.l.b16 %v114
    %v371 = vunpack.c.l.b16 %v115
    %v372 = vunpack.c.l.b16 %v116
    %v373 = vunpack.c.l.b16 %v117
    %v374 = vunpack.c.l.b16 %v118
    %v375 = vunpack.c.l.b16 %v119
    %v376 = vunpack.c.l.b16 %v120
    %v377 = vunpack.c.l.b16 %v121
    %v378 = vunpack.c.l.b16 %v122
    %v379 = vunpack.c.l.b16 %v123
    %v380 = vunpack.c.l.b16 %v124
    %v381 = vunpack.c.l.b16 %v125
    %v382 = vunpack.c.l.b16 %v126
    %v383 = vunpack.c.l.b16 %v127
    %v384 = vunpack.c.l.b16 %v128
    %v385 = vunpack.c.l.b16 %v129
    %v386 = vunpack.c.l.b16 %v130
    %v387 = vunpack.c.l.b16 %v131
    %v388 = vunpack.c.l.b16 %v132
    %v389 = vunpack.c.l.b16 %v133
    %v390 = vunpack.c.l.b16 %v134
    %v391 = vunpack.c.l.b16 %v135
    %v392 = vunpack.c.l.b16 %v136
    %v393 = vunpack.c.l.b16 %v137
    %v394 = vunpack.c.l.b16 %v138
    %v395 = vunpack.c.l.b16 %v139
    %v396 = vunpack.c.l.b16 %v140
    %v397 = vunpack.c.l.b16 %v141
    %v398 = vunpack.c.l.b16 %v142
    %v399 = vunpack.c.l.b16 %v143
    %v400 = vunpack.c.l.b16 %v144
    %v401 = vunpack.c.l.b16 %v145
    %v402 = vunpack.c.l.b16 %v146
    %v403 = vunpack.c.l.b16 %v147
    %v404 = vunpack.c.l.b16 %v148
    %v405 = vunpack.c.l.b16 %v149
    %v406 = vunpack.c.l.b16 %v150
    %v407 = vunpack.c.l.b16 %v151
    %v408 = vunpack.c.l.b16 %v152
    %v409 = vunpack.c.l.b16 %v153
    %v410 = vunpack.c.l.b16 %v154
    %v411 = vunpack.c.l.b16 %v155
    %v412 = vunpack.c.l.b16 %v156
    %v413 = vunpack.c.l.b16 %v157
    %v414 = vunpack.c.l.b16 %v158
    %v415 = vunpack.c.l.b16 %v159
    %v416 = vunpack.c.l.b16 %v160
    %v417 = vunpack.c.l.b16 %v161
    %v418 = vunpack.c.l.b16 %v162
    %v419 = vunpack.c.l.b16 %v163
    %v420 = vunpack.c.l.b16 %v164
    %v421 = vunpack.c.l.b16 %v165
    %v422 = vunpack.c.l.b16 %v166
    %v423 = vunpack.c.l.b16 %v167
    %v424 = vunpack.c.l.b16 %v168
    %v425 = vunpack.c.l.b16 %v169
    %v426 = vunpack.c.l.b16 %v170
    %v427 = vunpack.c.l.b16 %v171
    %v428 = vunpack.c.l.b16 %v172
    %v429 = vunpack.c.l.b16 %v173
    %v430 = vunpack.c.l.b16 %v174
    %v431 = vpack.c.b16 %v304, %v303
    %v432 = vpack.c.b16 %v306, %v305
    %v433 = vpack.c.b16 %v308, %v307
    %v434 = vpack.c.b16 %v310, %v309
    %v435 = vpack.c.b16 %v312, %v311
    %v436 = vpack.c.b16 %v314, %v313
    %v437 = vpack.c.b16 %v316, %v315
    %v438 = vpack.c.b16 %v318, %v317
    %v439 = vpack.c.b16 %v320, %v319
    %v440 = vpack.c.b16 %v322, %v321
    %v441 = vpack.c.b16 %v324, %v323
    %v442 = vpack.c.b16 %v326, %v325
    %v443 = vpack.c.b16 %v328, %v327
    %v444 = vpack.c.b16 %v330, %v329
    %v445 = vpack.c.b16 %v332, %v331
    %v446 = vpack.c.b16 %v334, %v333
    %v447 = vpack.c.b16 %v336, %v335
    %v448 = vpack.c.b16 %v338, %v337
    %v449 = vpack.c.b16 %v340, %v339
    %v450 = vpack.c.b16 %v342, %v341
    %v451 = vpack.c.b16 %v344, %v343
    %v452 = vpack.c.b16 %v346, %v345
    %v453 = vpack.c.b16 %v348, %v347
    %v454 = vpack.c.b16 %v350, %v349
    %v455 = vpack.c.b16 %v352, %v351
    %v456 = vpack.c.b16 %v354, %v353
    %v457 = vpack.c.b16 %v356, %v355
    %v458 = vpack.c.b16 %v358, %v357
    %v459 = vpack.c.b16 %v360, %v359
    %v460 = vpack.c.b16 %v362, %v361
    %v461 = vpack.c.b16 %v364, %v363
    %v462 = vpack.c.b16 %v366, %v365
    %v463 = vpack.c.b16 %v368, %v367
    %v464 = vpack.c.b16 %v370, %v369
    %v465 = vpack.c.b16 %v372, %v371
    %v466 = vpack.c.b16 %v374, %v373
    %v467 = vpack.c.b16 %v376, %v375
    %v468 = vpack.c.b16 %v378, %v377
    %v469 = vpack.c.b16 %v380, %v379
    %v470 = vpack.c.b16 %v382, %v381
    %v471 = vpack.c.b16 %v384, %v383
    %v472 = vpack.c.b16 %v386, %v385
    %v473 = vpack.c.b16 %v388, %v387
    %v474 = vpack.c.b16 %v390, %v389
    %v475 = vpack.c.b16 %v392, %v391
    %v476 = vpack.c.b16 %v394, %v393
    %v477 = vpack.c.b16 %v396, %v395
    %v478 = vpack.c.b16 %v398, %v397
    %v479 = vpack.c.b16 %v400, %v399
    %v480 = vpack.c.b16 %v402, %v401
    %v481 = vpack.c.b16 %v404, %v403
    %v482 = vpack.c.b16 %v406, %v405
    %v483 = vpack.c.b16 %v408, %v407
    %v484 = vpack.c.b16 %v410, %v409
    %v485 = vpack.c.b16 %v412, %v411
    %v486 = vpack.c.b16 %v414, %v413
    %v487 = vpack.c.b16 %v416, %v415
    %v488 = vpack.c.b16 %v418, %v417
    %v489 = vpack.c.b16 %v420, %v419
    %v490 = vpack.c.b16 %v422, %v421
    %v491 = vpack.c.b16 %v424, %v423
    %v492 = vpack.c.b16 %v426, %v425
    %v493 = vpack.c.b16 %v428, %v427
    %v494 = vpack.c.b16 %v430, %v429
    %559 = vmatprep.subr.bf16.mxu0 0
    %560 = vmatpush1.bf16.msra.mxu0 %v431
    %561 = vmatprep.subr.bf16.mxu0 0
    %562 = vmatpush1.bf16.msra.mxu0 %v432
    %563 = vmatprep.subr.bf16.mxu0 0
    %564 = vmatpush1.bf16.msra.mxu0 %v433
    %565 = vmatprep.subr.bf16.mxu0 0
    %566 = vmatpush1.bf16.msra.mxu0 %v434
    %567 = vmatprep.subr.bf16.mxu0 0
    %568 = vmatpush1.bf16.msra.mxu0 %v435
    %569 = vmatprep.subr.bf16.mxu0 0
    %570 = vmatpush1.bf16.msra.mxu0 %v436
    %571 = vmatprep.subr.bf16.mxu0 0
    %572 = vmatpush1.bf16.msra.mxu0 %v437
    %573 = vmatprep.subr.bf16.mxu0 0
    %574 = vmatpush1.bf16.msra.mxu0 %v438
    %575 = vmatprep.subr.bf16.mxu0 0
    %576 = vmatpush1.bf16.msra.mxu0 %v439
    %577 = vmatprep.subr.bf16.mxu0 0
    %578 = vmatpush1.bf16.msra.mxu0 %v440
    %579 = vmatprep.subr.bf16.mxu0 0
    %580 = vmatpush1.bf16.msra.mxu0 %v441
    %581 = vmatprep.subr.bf16.mxu0 0
    %582 = vmatpush1.bf16.msra.mxu0 %v442
    %583 = vmatprep.subr.bf16.mxu0 0
    %584 = vmatpush1.bf16.msra.mxu0 %v443
    %585 = vmatprep.subr.bf16.mxu0 0
    %586 = vmatpush1.bf16.msra.mxu0 %v444
    %587 = vmatprep.subr.bf16.mxu0 0
    %588 = vmatpush1.bf16.msra.mxu0 %v445
    %589 = vmatprep.subr.bf16.mxu0 0
    %590 = vmatpush1.bf16.msra.mxu0 %v446
    %591 = vmatprep.mubr.bf16.mxu0 %v40
    %592 = vmatmul.mubr.bf16.gmra.mrb[0].mxu0 %v39
    %v593 = vpop.f32.mrb[0].mxu0
    %v594 = vadd.f32 0.0, %v593
    %v595 = vpop.f32.mrb[0].mxu0
    %v596 = vpop.f32.mrb[0].mxu0
    %v597 = vadd.f32 0.0, %v596
    %v598 = vpop.f32.mrb[0].mxu0
    %599 = vdwg.mxu0
    %600 = vmatprep.subr.bf16.mxu0 0
    %601 = vmatpush1.bf16.msra.mxu0 %v447
    %602 = vmatprep.subr.bf16.mxu0 0
    %603 = vmatpush1.bf16.msra.mxu0 %v448
    %604 = vmatprep.subr.bf16.mxu0 0
    %605 = vmatpush1.bf16.msra.mxu0 %v449
    %606 = vmatprep.subr.bf16.mxu0 0
    %607 = vmatpush1.bf16.msra.mxu0 %v450
    %608 = vmatprep.subr.bf16.mxu0 0
    %609 = vmatpush1.bf16.msra.mxu0 %v451
    %610 = vmatprep.subr.bf16.mxu0 0
    %611 = vmatpush1.bf16.msra.mxu0 %v452
    %612 = vmatprep.subr.bf16.mxu0 0
    %613 = vmatpush1.bf16.msra.mxu0 %v453
    %614 = vmatprep.subr.bf16.mxu0 0
    %615 = vmatpush1.bf16.msra.mxu0 %v454
    %616 = vmatprep.subr.bf16.mxu0 0
    %617 = vmatpush1.bf16.msra.mxu0 %v455
    %618 = vmatprep.subr.bf16.mxu0 0
    %619 = vmatpush1.bf16.msra.mxu0 %v456
    %620 = vmatprep.subr.bf16.mxu0 0
    %621 = vmatpush1.bf16.msra.mxu0 %v457
    %622 = vmatprep.subr.bf16.mxu0 0
    %623 = vmatpush1.bf16.msra.mxu0 %v458
    %624 = vmatprep.subr.bf16.mxu0 0
    %625 = vmatpush1.bf16.msra.mxu0 %v459
    %626 = vmatprep.subr.bf16.mxu0 0
    %627 = vmatpush1.bf16.msra.mxu0 %v460
    %628 = vmatprep.subr.bf16.mxu0 0
    %629 = vmatpush1.bf16.msra.mxu0 %v461
    %630 = vmatprep.subr.bf16.mxu0 0
    %631 = vmatpush1.bf16.msra.mxu0 %v462
    %632 = vmatprep.mubr.bf16.mxu0 %v42
    %633 = vmatmul.mubr.bf16.gmra.mrb[0].mxu0 %v41
    %v634 = vpop.f32.mrb[0].mxu0
    %v635 = vadd.f32 %v594, %v634
    %v636 = vpop.f32.mrb[0].mxu0
    %v637 = vpop.f32.mrb[0].mxu0
    %v638 = vadd.f32 %v597, %v637
    %v639 = vpop.f32.mrb[0].mxu0
    %640 = vdwg.mxu0
    %641 = vmatprep.subr.bf16.mxu0 0
    %642 = vmatpush1.bf16.msra.mxu0 %v463
    %643 = vmatprep.subr.bf16.mxu0 0
    %644 = vmatpush1.bf16.msra.mxu0 %v464
    %645 = vmatprep.subr.bf16.mxu0 0
    %646 = vmatpush1.bf16.msra.mxu0 %v465
    %647 = vmatprep.subr.bf16.mxu0 0
    %648 = vmatpush1.bf16.msra.mxu0 %v466
    %649 = vmatprep.subr.bf16.mxu0 0
    %650 = vmatpush1.bf16.msra.mxu0 %v467
    %651 = vmatprep.subr.bf16.mxu0 0
    %652 = vmatpush1.bf16.msra.mxu0 %v468
    %653 = vmatprep.subr.bf16.mxu0 0
    %654 = vmatpush1.bf16.msra.mxu0 %v469
    %655 = vmatprep.subr.bf16.mxu0 0
    %656 = vmatpush1.bf16.msra.mxu0 %v470
    %657 = vmatprep.subr.bf16.mxu0 0
    %658 = vmatpush1.bf16.msra.mxu0 %v471
    %659 = vmatprep.subr.bf16.mxu0 0
    %660 = vmatpush1.bf16.msra.mxu0 %v472
    %661 = vmatprep.subr.bf16.mxu0 0
    %662 = vmatpush1.bf16.msra.mxu0 %v473
    %663 = vmatprep.subr.bf16.mxu0 0
    %664 = vmatpush1.bf16.msra.mxu0 %v474
    %665 = vmatprep.subr.bf16.mxu0 0
    %666 = vmatpush1.bf16.msra.mxu0 %v475
    %667 = vmatprep.subr.bf16.mxu0 0
    %668 = vmatpush1.bf16.msra.mxu0 %v476
    %669 = vmatprep.subr.bf16.mxu0 0
    %670 = vmatpush1.bf16.msra.mxu0 %v477
    %671 = vmatprep.subr.bf16.mxu0 0
    %672 = vmatpush1.bf16.msra.mxu0 %v478
    %673 = vmatprep.mubr.bf16.mxu0 %v44
    %674 = vmatmul.mubr.bf16.gmra.mrb[0].mxu0 %v43
    %v675 = vpop.f32.mrb[0].mxu0
    %v676 = vadd.f32 %v635, %v675
    %v677 = vpop.f32.mrb[0].mxu0
    %v678 = vpop.f32.mrb[0].mxu0
    %v679 = vadd.f32 %v638, %v678
    %v680 = vpop.f32.mrb[0].mxu0
    %681 = vdwg.mxu0
    %682 = vmatprep.subr.bf16.mxu0 0
    %683 = vmatpush1.bf16.msra.mxu0 %v479
    %684 = vmatprep.subr.bf16.mxu0 0
    %685 = vmatpush1.bf16.msra.mxu0 %v480
    %686 = vmatprep.subr.bf16.mxu0 0
    %687 = vmatpush1.bf16.msra.mxu0 %v481
    %688 = vmatprep.subr.bf16.mxu0 0
    %689 = vmatpush1.bf16.msra.mxu0 %v482
    %690 = vmatprep.subr.bf16.mxu0 0
    %691 = vmatpush1.bf16.msra.mxu0 %v483
    %692 = vmatprep.subr.bf16.mxu0 0
    %693 = vmatpush1.bf16.msra.mxu0 %v484
    %694 = vmatprep.subr.bf16.mxu0 0
    %695 = vmatpush1.bf16.msra.mxu0 %v485
    %696 = vmatprep.subr.bf16.mxu0 0
    %697 = vmatpush1.bf16.msra.mxu0 %v486
    %698 = vmatprep.subr.bf16.mxu0 0
    %699 = vmatpush1.bf16.msra.mxu0 %v487
    %700 = vmatprep.subr.bf16.mxu0 0
    %701 = vmatpush1.bf16.msra.mxu0 %v488
    %702 = vmatprep.subr.bf16.mxu0 0
    %703 = vmatpush1.bf16.msra.mxu0 %v489
    %704 = vmatprep.subr.bf16.mxu0 0
    %705 = vmatpush1.bf16.msra.mxu0 %v490
    %706 = vmatprep.subr.bf16.mxu0 0
    %707 = vmatpush1.bf16.msra.mxu0 %v491
    %708 = vmatprep.subr.bf16.mxu0 0
    %709 = vmatpush1.bf16.msra.mxu0 %v492
    %710 = vmatprep.subr.bf16.mxu0 0
    %711 = vmatpush1.bf16.msra.mxu0 %v493
    %712 = vmatprep.subr.bf16.mxu0 0
    %713 = vmatpush1.bf16.msra.mxu0 %v494
    %714 = vmatprep.mubr.bf16.mxu0 %v46
    %715 = vmatmul.mubr.bf16.gmra.mrb[0].mxu0 %v45
    %v716 = vpop.f32.mrb[0].mxu0
    %v717 = vadd.f32 %v676, %v716
    %v718 = vpop.f32.mrb[0].mxu0
    %v719 = vpop.f32.mrb[0].mxu0
    %v720 = vadd.f32 %v679, %v719
    %v721 = vpop.f32.mrb[0].mxu0
    %722 = vdwg.mxu0
    %v723 = vadd.f32 %v21, %v717
    %v724 = vadd.f32 %v22, %v720
    %725 = vst [vmem:[#allocation2] sm:$0xff] %v723
    %726 = vst [vmem:[#allocation2 + $0x8] sm:$0xff] %v724
    // Predicated region
    $region18: #{_lambda_.1} parent=1 // pred_check
      %p727 = pneg %p15
    $region19: #{_lambda_.1} parent=1 // pred_check_branch
      %729 = sbr.rel (%p727) target = $region21
    $region20: #{_lambda_.1} parent=1 // pred_region
      %v730 = vld [vmem:[#allocation2] sm:$0xff]
      %v731 = vld [vmem:[#allocation2 + $0x8] sm:$0xff]
      %v732 = vld [vmem:[%s2] sm:$0x1]
      %v734 = vlaneseq
      %v735 = vshrl.u32 %v734, 7
      %v736 = vsub.s32 0, %v735
      %v737 = vrot.slane %v732, %v736
      %v739 = vadd.f32 %v730, %v737
      %v740 = vadd.f32 %v731, %v737
      %v741 = vpack.c.bf16 %v740, %v739
      %v743 = vunpack.c.l.b16 %v741
      %v744 = vunpack.c.h.b16 %v741
      %v745 = vpack.c.b16 %v743, %v743
      %v746 = vpack.c.b16 %v744, %v744
      %749 = vst [vmem:[#allocation3] sm:$0xf] %v745
      %750 = vst [vmem:[#allocation3 + $0x4] sm:$0xf] %v746
    $region21: #{_lambda_.1} parent=1 // pred_fallthru
      _
    // Predicated region
    $region22: #{_lambda_.1} parent=1 // pred_check
      _
    $region23: #{_lambda_.1} parent=1 // pred_check_branch
      %752 = sbr.rel (0) target = $region25
    $region24: #{_lambda_.1} parent=1 // pred_region
      // Predicated region
      $region26: #{_lambda_.1} parent=24 // pred_check
        _
      $region27: #{_lambda_.1} parent=24 // pred_check_branch
        %754 = sbr.rel (0) target = $region29
      $region28: #{_lambda_.1} parent=24 // pred_region
        // Predicated region
        $region30: #{_lambda_.1} parent=28 // pred_check
          _
        $region31: #{_lambda_.1} parent=28 // pred_check_branch
          %756 = sbr.rel target = $region33
        $region32: #{_lambda_.1} parent=28 // pred_region
          // Predicated region
          $region45: #{_lambda_.1} parent=32 // pred_check
            _
          $region46: #{_lambda_.1} parent=32 // pred_check_branch
            %771 = sbr.rel (0) target = $region48
          $region47: #{_lambda_.1} parent=32 // pred_region
            loop: start=0, step=1, limit=1
            $region49: #{_lambda_.1} parent=47 // loop_pre_header
              _
            $region50: #{_lambda_.1} parent=47 // loop_header
              %s774 = sphi 0, %s778
              %p775 = scmp.ge.s32.totalorder %s774, 1
              %s779 = sphi [#allocation3], [#allocation3]
              %s780 = sphi %s3, %s3
            $region51: #{_lambda_.1} parent=47 // loop_header_branch
              %777 = sbr.rel (%p775) target = $region55
            $region52: #{_lambda_.1} parent=47 // loop_body
              %v781 = vld [vmem:[%s779] sm:$0xf]
              %782 = vst [vmem:[%s780] sm:$0xf] %v781
            $region53: #{_lambda_.1} parent=47 // loop_footer
              %s778 = sadd.s32 1, %s774
            $region54: #{_lambda_.1} parent=47 // loop_footer_branch
              %773 = sbr.rel target = $region50
            $region55: #{_lambda_.1} parent=47 // loop_exit
              _
          $region48: #{_lambda_.1} parent=32 // pred_fallthru
            _
        $region33: #{_lambda_.1} parent=28 // pred_fallthru
          _
        // Predicated region
        $region34: #{_lambda_.1} parent=28 // pred_check
          _
        $region35: #{_lambda_.1} parent=28 // pred_check_branch
          %758 = sbr.rel (0) target = $region37
        $region36: #{_lambda_.1} parent=28 // pred_region
          loop: start=0, step=1, limit=1
          $region38: #{_lambda_.1} parent=36 // loop_pre_header
            _
          $region39: #{_lambda_.1} parent=36 // loop_header
            %s761 = sphi 0, %s765
            %p762 = scmp.ge.s32.totalorder %s761, 1
            %s766 = sphi [#allocation3], [#allocation3]
            %s767 = sphi %s3, %s3
          $region40: #{_lambda_.1} parent=36 // loop_header_branch
            %764 = sbr.rel (%p762) target = $region44
          $region41: #{_lambda_.1} parent=36 // loop_body
            %v768 = vld [vmem:[%s766] sm:$0xf]
            %769 = vst [vmem:[%s767] sm:$0xf] %v768
          $region42: #{_lambda_.1} parent=36 // loop_footer
            %s765 = sadd.s32 1, %s761
          $region43: #{_lambda_.1} parent=36 // loop_footer_branch
            %760 = sbr.rel target = $region39
          $region44: #{_lambda_.1} parent=36 // loop_exit
            _
        $region37: #{_lambda_.1} parent=28 // pred_fallthru
          _
      $region29: #{_lambda_.1} parent=24 // pred_fallthru
        _
      %783 = vnop
    $region25: #{_lambda_.1} parent=1 // pred_fallthru
      _
    // Predicated region
    $region56: #{_lambda_.1} parent=1 // pred_check
      _
    $region57: #{_lambda_.1} parent=1 // pred_check_branch
      %785 = sbr.rel (0) target = $region59
    $region58: #{_lambda_.1} parent=1 // pred_region
      _
    $region59: #{_lambda_.1} parent=1 // pred_fallthru
      _

</llo_original>
